<compile_context>
chip_gen: v7x
topology: tpu7x:2x2x1
jax: 0.10.0
libtpu: 0.0.40
codegen_flags: <defaults>
</compile_context>

<pallas_src>
import jax
import jax.numpy as jnp
from jax.experimental import pallas as pl
from jax.experimental.pallas import tpu as pltpu


def _attention_kernel(x_ref, q_ref, o_ref):
    # x_ref : (Bb, T, H)  lstm_output block for Bb batch rows
    # q_ref : (Bb, H)     precomputed query = Linear(lstm_output[:, -1])
    # o_ref : (Bb, H)     context output block (dense 2-D slab)
    xf = x_ref[...].astype(jnp.float32)                 # single f32 cast, reused
    qf = q_ref[...].astype(jnp.float32)[:, None, :]     # (Bb, 1, H)

    # energy[b, 0, t] = sum_h q[b, h] * x[b, t, h]      (batched contraction)
    energy = jnp.einsum("bqh,bth->bqt", qf, xf,
                        preferred_element_type=jnp.float32)   # (Bb, 1, T)

    # softmax over the sequence axis (PyTorch dim=1)
    m = jnp.max(energy, axis=-1, keepdims=True)
    e = jnp.exp(energy - m)
    denom = jnp.sum(e, axis=-1, keepdims=True)
    attn = e * pl.reciprocal(denom, approx=True)              # EUP vrcp, ~free

    # context[b, 0, h] = sum_t attn[b, 0, t] * x[b, t, h]
    ctx = jnp.einsum("bqt,bth->bqh", attn, xf,
                     preferred_element_type=jnp.float32)      # (Bb, 1, H)

    o_ref[...] = ctx[:, 0, :].astype(o_ref.dtype)


def attention_forward(lstm_output, weight, bias, *, block_b=8):
    """lstm_output: [B, T, H]; weight: [H_out, H_in] (PyTorch layout); bias: [H_out]."""
    B, T, H = lstm_output.shape

    # Hoist the query Linear out of the kernel: one batched matmul at full
    # MXU utilization instead of a per-row (1,H)@(H,H) inside the kernel.
    query = lstm_output[:, -1, :] @ weight.T + bias           # [B, H]

    bb = min(block_b, B)
    pad_b = (-B) % bb
    if pad_b:
        # Padded rows are all-zero: softmax is uniform, context is zero; we
        # slice them off below.
        lstm_output = jnp.pad(lstm_output, ((0, pad_b), (0, 0), (0, 0)))
        query = jnp.pad(query, ((0, pad_b), (0, 0)))
    bp = B + pad_b

    out = pl.pallas_call(
        _attention_kernel,
        out_shape=jax.ShapeDtypeStruct((bp, H), lstm_output.dtype),
        grid_spec=pltpu.PrefetchScalarGridSpec(
            num_scalar_prefetch=0,
            grid=(bp // bb,),
            in_specs=[
                pl.BlockSpec((bb, T, H), lambda b: (b, 0, 0)),  # Bb seq blocks
                pl.BlockSpec((bb, H), lambda b: (b, 0)),        # Bb query rows
            ],
            out_specs=pl.BlockSpec((bb, H), lambda b: (b, 0)),  # dense (Bb, H)
        ),
        compiler_params=pltpu.CompilerParams(
            dimension_semantics=("parallel",)),
    )(lstm_output, query)
    return out[:B]


def attention_reference(lstm_output, weight, bias):
    # Pure-JAX reference mirroring the PyTorch forward.
    query = lstm_output[:, -1] @ weight.T + bias            # [B, H]
    energy = jnp.einsum("bth,bh->bt", lstm_output, query)   # [B, T]
    w = jax.nn.softmax(energy, axis=1)                      # [B, T]
    return jnp.einsum("bt,bth->bh", w, lstm_output)         # [B, H]


if __name__ == "__main__":
    hidden_size = 64
    B, T, H = 2, 8, hidden_size

    key = jax.random.PRNGKey(0)
    k_x, k_w, k_b = jax.random.split(key, 3)

    lstm_output = jax.random.normal(k_x, (B, T, H), dtype=jnp.float32)
    # Deterministic "Linear(hidden_size, hidden_size)" parameters.
    bound = 1.0 / (hidden_size ** 0.5)
    weight = jax.random.uniform(k_w, (H, H), minval=-bound, maxval=bound,
                                dtype=jnp.float32)
    bias = jax.random.uniform(k_b, (H,), minval=-bound, maxval=bound,
                              dtype=jnp.float32)

    out = attention_forward(lstm_output, weight, bias)
    jax.block_until_ready(out)

    ref = attention_reference(lstm_output, weight, bias)
    assert out.shape == (B, H)
    # Slightly relaxed tolerance to accommodate the EUP approximate reciprocal.
    assert jnp.allclose(out, ref, atol=2e-3, rtol=2e-3), "mismatch vs reference"

    print("KERNEL_OK")
</pallas_src>

<mosaic_0001>
module attributes {stable_mosaic.version = 11 : i64} {
  func.func @_attention_kernel(%arg0: i32, %arg1: memref<2x8x64xf32, #tpu.memory_space<vmem>>, %arg2: memref<2x64xf32, #tpu.memory_space<vmem>>, %arg3: memref<2x64xf32, #tpu.memory_space<vmem>>) attributes {dimension_semantics = [#tpu.dimension_semantics<parallel>], iteration_bounds = array<i64: 1>, scalar_prefetch = 0 : i64, scratch_operands = 0 : i64, tpu.core_type = #tpu.core_type<tc>, window_params = [{transform_indices = @transform_0, window_bounds = array<i64: 2, 8, 64>}, {transform_indices = @transform_1, window_bounds = array<i64: 2, 64>}, {transform_indices = @transform_2, window_bounds = array<i64: 2, 64>}]} {
    %c0 = arith.constant 0 : index
    %c0_0 = arith.constant 0 : index
    %c0_1 = arith.constant 0 : index
    %0 = vector.load %arg1[%c0, %c0_0, %c0_1] : memref<2x8x64xf32, #tpu.memory_space<vmem>>, vector<2x8x64xf32>
    %c0_2 = arith.constant 0 : index
    %c0_3 = arith.constant 0 : index
    %1 = vector.load %arg2[%c0_2, %c0_3] : memref<2x64xf32, #tpu.memory_space<vmem>>, vector<2x64xf32>
    %2 = vector.shape_cast %1 : vector<2x64xf32> to vector<2x1x64xf32>
    "tpu.trace_start"() <{level = 10 : i32, message = "bqh,bth->bqt"}> : () -> ()
    %cst = arith.constant dense<0.000000e+00> : vector<2x1x8xf32>
    %3 = tpu.matmul %2, %0, %cst {dimension_numbers = #tpu.dot_dimension_numbers<[2], [2], [1], [1], [0, 0, 0, 1, 1, 1], [0], [0]>} : vector<2x1x64xf32>, vector<2x8x64xf32>, vector<2x1x8xf32> -> vector<2x1x8xf32>
    "tpu.trace_stop"() : () -> ()
    %cst_4 = arith.constant dense<0xFF800000> : vector<2x1xf32>
    %4 = vector.multi_reduction <maximumf>, %3, %cst_4 [2] : vector<2x1x8xf32> to vector<2x1xf32>
    %5 = vector.shape_cast %4 : vector<2x1xf32> to vector<2x1x1xf32>
    %6 = vector.broadcast %5 : vector<2x1x1xf32> to vector<2x1x8xf32>
    %7 = arith.subf %3, %6 : vector<2x1x8xf32>
    %8 = math.exp %7 : vector<2x1x8xf32>
    %cst_5 = arith.constant dense<0.000000e+00> : vector<2x1xf32>
    %9 = vector.multi_reduction <add>, %8, %cst_5 [2] : vector<2x1x8xf32> to vector<2x1xf32>
    %10 = vector.shape_cast %9 : vector<2x1xf32> to vector<2x1x1xf32>
    %11 = tpu.reciprocal %10 {approx = true} : vector<2x1x1xf32> -> vector<2x1x1xf32>
    %12 = vector.broadcast %11 : vector<2x1x1xf32> to vector<2x1x8xf32>
    %13 = arith.mulf %8, %12 : vector<2x1x8xf32>
    "tpu.trace_start"() <{level = 10 : i32, message = "bqt,bth->bqh"}> : () -> ()
    %cst_6 = arith.constant dense<0.000000e+00> : vector<2x1x64xf32>
    %14 = tpu.matmul %13, %0, %cst_6 {dimension_numbers = #tpu.dot_dimension_numbers<[2], [1], [1], [2], [0, 0, 0, 1, 1, 2], [0], [0]>} : vector<2x1x8xf32>, vector<2x8x64xf32>, vector<2x1x64xf32> -> vector<2x1x64xf32>
    "tpu.trace_stop"() : () -> ()
    %15 = vector.shape_cast %14 : vector<2x1x64xf32> to vector<2x64xf32>
    %c0_7 = arith.constant 0 : index
    %c0_8 = arith.constant 0 : index
    %16 = vector.load %arg3[%c0_7, %c0_8] : memref<2x64xf32, #tpu.memory_space<vmem>>, vector<2x64xf32>
    tpu.vector_store %arg3[%c0_7, %c0_8], %15 {strides = array<i32>} : memref<2x64xf32, #tpu.memory_space<vmem>>, vector<2x64xf32>,
    return
  }
  func.func @transform_0(%arg0: i32) -> (i32, i32, i32) {
    %c0_i32 = arith.constant 0 : i32
    %c0_i32_0 = arith.constant 0 : i32
    %c0_i32_1 = arith.constant 0 : i32
    return %arg0, %c0_i32, %c0_i32_0 : i32, i32, i32
  }
  func.func @transform_1(%arg0: i32) -> (i32, i32) {
    %c0_i32 = arith.constant 0 : i32
    %c0_i32_0 = arith.constant 0 : i32
    return %arg0, %c0_i32 : i32, i32
  }
  func.func @transform_2(%arg0: i32) -> (i32, i32) {
    %c0_i32 = arith.constant 0 : i32
    %c0_i32_0 = arith.constant 0 : i32
    return %arg0, %c0_i32 : i32, i32
  }
}

</mosaic_0001>

<llo_original>
// kernel: tpu_custom_call.1
$region0: #{tpu_custom_call.1}
  #allocation0 [shape = 'u32[]', space=smem, size = 0x4, offset = 0x4, fixed_abs, tag = 'smem constant byte address 0x4 - core index']
  #allocation1 [shape = 'u32[144,128]{1,0:T(1,128)}', space=vmem, size = 0x12000, scoped, tag = 'internal scratch']
  %s0 = inlined_call_operand.hbm [shape: f32[2,8,64], index: 0, kind: input, shape index: {}]
  %s1 = inlined_call_operand.vmem [shape: f32[2,64], index: 1, kind: input, shape index: {}]
  %s2 = inlined_call_operand.hbm [shape: f32[2,64], index: 2, kind: output, shape index: {}]
  %s3 = sld [smem:[#allocation0]]
  $region22: #{tpu_custom_call.1} parent=0
    _
  %s5 = ssub.s32 1, %s3
  %s6 = scalar_select 0, %s5, %s3
  $region1: #{tpu_custom_call.1} parent=0
    #allocation2 [shape = 'u8[8192]{0}', space=vmem, size = 0x2000, scoped, tag = 'input window, operand 0, single buffered']
    #allocation3 [shape = 's32[1]{0}', space=sflag, size = 0x4, scoped, tag = 'scoped memory for tpu_custom_call.1']
    #allocation4 [shape = 's32[1]{0}', space=sflag, size = 0x4, scoped, tag = 'scoped memory for tpu_custom_call.1']
    #allocation5 [shape = 'u8[1024]{0}', space=vmem, size = 0x400, scoped, tag = 'output window, operand 0, single buffered']
    %7 = vsyncpa [#allocation3], 0
    %8 = vsyncpa [#allocation4], 0
    // Predicated region
    $region2: #{tpu_custom_call.1} parent=1 // pred_check
      _
    $region3: #{tpu_custom_call.1} parent=1 // pred_check_branch
      %10 = sbr.rel (0) target = $region5
    $region4: #{tpu_custom_call.1} parent=1 // pred_region
      %s12 = ssub.s32 256, 256
      %13 = vsyncadd [#allocation3], %s12
      %s14 = sshll.u32 [#allocation2], 4
      %s15 = int_to_ptr.vmem [resolvable:$true] %s14
      %20 = dma.hbm_to_vmem [thread:$0]  %s0, 256, %s15, [#allocation3], 128, 128, 8
    $region5: #{tpu_custom_call.1} parent=1 // pred_fallthru
      _
    // Predicated region
    $region6: #{tpu_custom_call.1} parent=1 // pred_check
      _
    $region7: #{tpu_custom_call.1} parent=1 // pred_check_branch
      %22 = sbr.rel (0) target = $region9
    $region8: #{tpu_custom_call.1} parent=1 // pred_region
      _
    $region9: #{tpu_custom_call.1} parent=1 // pred_fallthru
      _
    // Predicated region
    $region10: #{tpu_custom_call.1} parent=1 // pred_check
      _
    $region11: #{tpu_custom_call.1} parent=1 // pred_check_branch
      %24 = sbr.rel (0) target = $region13
    $region12: #{tpu_custom_call.1} parent=1 // pred_region
      %25 = dma.done [#allocation3], 256
    $region13: #{tpu_custom_call.1} parent=1 // pred_fallthru
      _
    %v26 = vld [vmem:[#allocation2] sm:$0xff]
    %v27 = vld [vmem:[#allocation2 + $0x8] sm:$0xff]
    %v28 = vld [vmem:[%s1] sm:$0x3]
    %v31 = vunpack.c.l.s4 1966171168
    %v32 = vunpack.c.0.s8 %v31
    %v33 = vlaneseq
    %v34 = vshrl.u32 %v33, 7
    %v35 = vsub.s32 %v32, %v34
    %v36 = vrot.slane %v28, %v35
    %v37 = vcombine.high %v36, %v36
    %v39 = vunpack.c.l.s4 1966171168
    %v40 = vunpack.c.0.s8 %v39
    %v41 = vlaneseq
    %v42 = vshrl.u32 %v41, 7
    %v43 = vsub.s32 %v40, %v42
    %v44 = vrot.slane %v36, %v43
    %v46 = vunpack.c.l.s4 1966171168
    %v47 = vunpack.c.0.s8 %v46
    %v48 = vlaneseq
    %v49 = vshrl.u32 %v48, 7
    %v50 = vsub.s32 %v47, %v49
    %v51 = vrot.slane %v37, %v50
    %vm52 = vcmask 523264
    %v53 = vsel %vm52, %v44, 0
    %v56 = vsel %vm52, %v26, 0
    %58 = vmatprep.subr.mxu0 0.0
    %59 = vmatpush1.xpose.msra.mxu0 %v56
    %60 = vmatprep.subr.mxu0 0.0
    %61 = vmatpush1.xpose.msra.mxu0 0.0
    %62 = vmatprep.subr.mxu0 0.0
    %63 = vmatpush1.xpose.msra.mxu0 0.0
    %64 = vmatprep.subr.mxu0 0.0
    %65 = vmatpush1.xpose.msra.mxu0 0.0
    %66 = vmatprep.subr.mxu0 0.0
    %67 = vmatpush1.xpose.msra.mxu0 0.0
    %68 = vmatprep.subr.mxu0 0.0
    %69 = vmatpush1.xpose.msra.mxu0 0.0
    %70 = vmatprep.subr.mxu0 0.0
    %71 = vmatpush1.xpose.msra.mxu0 0.0
    %72 = vmatprep.subr.mxu0 0.0
    %73 = vmatpush1.xpose.msra.mxu0 0.0
    %74 = vmatprep.subr.mxu0 0.0
    %75 = vmatpush1.xpose.msra.mxu0 0.0
    %76 = vmatprep.subr.mxu0 0.0
    %77 = vmatpush1.xpose.msra.mxu0 0.0
    %78 = vmatprep.subr.mxu0 0.0
    %79 = vmatpush1.xpose.msra.mxu0 0.0
    %80 = vmatprep.subr.mxu0 0.0
    %81 = vmatpush1.xpose.msra.mxu0 0.0
    %82 = vmatprep.subr.mxu0 0.0
    %83 = vmatpush1.xpose.msra.mxu0 0.0
    %84 = vmatprep.subr.mxu0 0.0
    %85 = vmatpush1.xpose.msra.mxu0 0.0
    %86 = vmatprep.subr.mxu0 0.0
    %87 = vmatpush1.xpose.msra.mxu0 0.0
    %88 = vmatprep.subr.mxu0 0.0
    %89 = vmatpush1.xpose.msra.mxu0 0.0
    %90 = vmatprep.subr.mxu0 0.0
    %91 = vmatpush1.xpose.msra.mxu0 0.0
    %92 = vmatprep.subr.mxu0 0.0
    %93 = vmatpush1.xpose.msra.mxu0 0.0
    %94 = vmatprep.subr.mxu0 0.0
    %95 = vmatpush1.xpose.msra.mxu0 0.0
    %96 = vmatprep.subr.mxu0 0.0
    %97 = vmatpush1.xpose.msra.mxu0 0.0
    %98 = vmatprep.subr.mxu0 0.0
    %99 = vmatpush1.xpose.msra.mxu0 0.0
    %100 = vmatprep.subr.mxu0 0.0
    %101 = vmatpush1.xpose.msra.mxu0 0.0
    %102 = vmatprep.subr.mxu0 0.0
    %103 = vmatpush1.xpose.msra.mxu0 0.0
    %104 = vmatprep.subr.mxu0 0.0
    %105 = vmatpush1.xpose.msra.mxu0 0.0
    %106 = vmatprep.subr.mxu0 0.0
    %107 = vmatpush1.xpose.msra.mxu0 0.0
    %108 = vmatprep.subr.mxu0 0.0
    %109 = vmatpush1.xpose.msra.mxu0 0.0
    %110 = vmatprep.subr.mxu0 0.0
    %111 = vmatpush1.xpose.msra.mxu0 0.0
    %112 = vmatprep.subr.mxu0 0.0
    %113 = vmatpush1.xpose.msra.mxu0 0.0
    %114 = vmatprep.subr.mxu0 0.0
    %115 = vmatpush1.xpose.msra.mxu0 0.0
    %116 = vmatprep.subr.mxu0 0.0
    %117 = vmatpush1.xpose.msra.mxu0 0.0
    %118 = vmatprep.subr.mxu0 0.0
    %119 = vmatpush1.xpose.msra.mxu0 0.0
    %120 = vmatprep.subr.mxu0 0.0
    %121 = vmatpush1.xpose.msra.mxu0 0.0
    %122 = vmatprep.mubr.f32.mxu0 0.0
    %123 = vmatmul.mubr.f32.gmra.mrb[0].mxu0 %v53
    %v124 = vpop.f32.mrb[0].mxu0
    %v125 = vadd.f32 0.0, %v124
    %v126 = vpop.f32.mrb[0].mxu0
    %127 = vdwg.mxu0
    %v128 = vsel %vm52, %v51, 0
    %v131 = vsel %vm52, %v27, 0
    %133 = vmatprep.subr.mxu0 0.0
    %134 = vmatpush1.xpose.msra.mxu0 %v131
    %135 = vmatprep.subr.mxu0 0.0
    %136 = vmatpush1.xpose.msra.mxu0 0.0
    %137 = vmatprep.subr.mxu0 0.0
    %138 = vmatpush1.xpose.msra.mxu0 0.0
    %139 = vmatprep.subr.mxu0 0.0
    %140 = vmatpush1.xpose.msra.mxu0 0.0
    %141 = vmatprep.subr.mxu0 0.0
    %142 = vmatpush1.xpose.msra.mxu0 0.0
    %143 = vmatprep.subr.mxu0 0.0
    %144 = vmatpush1.xpose.msra.mxu0 0.0
    %145 = vmatprep.subr.mxu0 0.0
    %146 = vmatpush1.xpose.msra.mxu0 0.0
    %147 = vmatprep.subr.mxu0 0.0
    %148 = vmatpush1.xpose.msra.mxu0 0.0
    %149 = vmatprep.subr.mxu0 0.0
    %150 = vmatpush1.xpose.msra.mxu0 0.0
    %151 = vmatprep.subr.mxu0 0.0
    %152 = vmatpush1.xpose.msra.mxu0 0.0
    %153 = vmatprep.subr.mxu0 0.0
    %154 = vmatpush1.xpose.msra.mxu0 0.0
    %155 = vmatprep.subr.mxu0 0.0
    %156 = vmatpush1.xpose.msra.mxu0 0.0
    %157 = vmatprep.subr.mxu0 0.0
    %158 = vmatpush1.xpose.msra.mxu0 0.0
    %159 = vmatprep.subr.mxu0 0.0
    %160 = vmatpush1.xpose.msra.mxu0 0.0
    %161 = vmatprep.subr.mxu0 0.0
    %162 = vmatpush1.xpose.msra.mxu0 0.0
    %163 = vmatprep.subr.mxu0 0.0
    %164 = vmatpush1.xpose.msra.mxu0 0.0
    %165 = vmatprep.subr.mxu0 0.0
    %166 = vmatpush1.xpose.msra.mxu0 0.0
    %167 = vmatprep.subr.mxu0 0.0
    %168 = vmatpush1.xpose.msra.mxu0 0.0
    %169 = vmatprep.subr.mxu0 0.0
    %170 = vmatpush1.xpose.msra.mxu0 0.0
    %171 = vmatprep.subr.mxu0 0.0
    %172 = vmatpush1.xpose.msra.mxu0 0.0
    %173 = vmatprep.subr.mxu0 0.0
    %174 = vmatpush1.xpose.msra.mxu0 0.0
    %175 = vmatprep.subr.mxu0 0.0
    %176 = vmatpush1.xpose.msra.mxu0 0.0
    %177 = vmatprep.subr.mxu0 0.0
    %178 = vmatpush1.xpose.msra.mxu0 0.0
    %179 = vmatprep.subr.mxu0 0.0
    %180 = vmatpush1.xpose.msra.mxu0 0.0
    %181 = vmatprep.subr.mxu0 0.0
    %182 = vmatpush1.xpose.msra.mxu0 0.0
    %183 = vmatprep.subr.mxu0 0.0
    %184 = vmatpush1.xpose.msra.mxu0 0.0
    %185 = vmatprep.subr.mxu0 0.0
    %186 = vmatpush1.xpose.msra.mxu0 0.0
    %187 = vmatprep.subr.mxu0 0.0
    %188 = vmatpush1.xpose.msra.mxu0 0.0
    %189 = vmatprep.subr.mxu0 0.0
    %190 = vmatpush1.xpose.msra.mxu0 0.0
    %191 = vmatprep.subr.mxu0 0.0
    %192 = vmatpush1.xpose.msra.mxu0 0.0
    %193 = vmatprep.subr.mxu0 0.0
    %194 = vmatpush1.xpose.msra.mxu0 0.0
    %195 = vmatprep.subr.mxu0 0.0
    %196 = vmatpush1.xpose.msra.mxu0 0.0
    %197 = vmatprep.mubr.f32.mxu0 0.0
    %198 = vmatmul.mubr.f32.gmra.mrb[0].mxu0 %v128
    %v199 = vpop.f32.mrb[0].mxu0
    %v200 = vadd.f32 0.0, %v199
    %v201 = vpop.f32.mrb[0].mxu0
    %202 = vdwg.mxu0
    %vm203 = vcmask 57344
    %v204 = vsel %vm203, %v125, -inf
    %205 = vmax.xlane.f32.xlu0 %v204
    %v206 = vpop.xlane.xlu0 %205
    %v207 = vsel %vm203, %v200, -inf
    %208 = vmax.xlane.f32.xlu0 %v207
    %v209 = vpop.xlane.xlu0 %208
    %v210 = vsub.f32 %v125, %v206
    %v211 = vsub.f32 %v200, %v209
    %v212 = vmul.f32 %v210, 1.442695
    %v213 = vpow.pop %v212
    %v214 = vmul.f32 %v211, 1.442695
    %v215 = vpow.pop %v214
    %v216 = vsel %vm203, %v213, 0.0
    %217 = vadd.xlane.f32.xlu0 %v216
    %v218 = vpop.xlane.xlu0 %217
    %v219 = vsel %vm203, %v215, 0.0
    %220 = vadd.xlane.f32.xlu0 %v219
    %v221 = vpop.xlane.xlu0 %220
    %v222 = vrcp.pop %v218
    %v223 = vrcp.pop %v221
    %v224 = vmul.f32 %v213, %v222
    %v225 = vmul.f32 %v215, %v223
    %vm226 = vcmask 64512
    %v228 = vsel %vm226, %v224, 0
    %230 = vmatprep.subr.mxu0 0.0
    %231 = vmatpush1.msra.mxu0 %v26
    %232 = vmatprep.subr.mxu0 0.0
    %233 = vmatpush1.msra.mxu0 0.0
    %234 = vmatprep.subr.mxu0 0.0
    %235 = vmatpush1.msra.mxu0 0.0
    %236 = vmatprep.subr.mxu0 0.0
    %237 = vmatpush1.msra.mxu0 0.0
    %238 = vmatprep.subr.mxu0 0.0
    %239 = vmatpush1.msra.mxu0 0.0
    %240 = vmatprep.subr.mxu0 0.0
    %241 = vmatpush1.msra.mxu0 0.0
    %242 = vmatprep.subr.mxu0 0.0
    %243 = vmatpush1.msra.mxu0 0.0
    %244 = vmatprep.subr.mxu0 0.0
    %245 = vmatpush1.msra.mxu0 0.0
    %246 = vmatprep.subr.mxu0 0.0
    %247 = vmatpush1.msra.mxu0 0.0
    %248 = vmatprep.subr.mxu0 0.0
    %249 = vmatpush1.msra.mxu0 0.0
    %250 = vmatprep.subr.mxu0 0.0
    %251 = vmatpush1.msra.mxu0 0.0
    %252 = vmatprep.subr.mxu0 0.0
    %253 = vmatpush1.msra.mxu0 0.0
    %254 = vmatprep.subr.mxu0 0.0
    %255 = vmatpush1.msra.mxu0 0.0
    %256 = vmatprep.subr.mxu0 0.0
    %257 = vmatpush1.msra.mxu0 0.0
    %258 = vmatprep.subr.mxu0 0.0
    %259 = vmatpush1.msra.mxu0 0.0
    %260 = vmatprep.subr.mxu0 0.0
    %261 = vmatpush1.msra.mxu0 0.0
    %262 = vmatprep.subr.mxu0 0.0
    %263 = vmatpush1.msra.mxu0 0.0
    %264 = vmatprep.subr.mxu0 0.0
    %265 = vmatpush1.msra.mxu0 0.0
    %266 = vmatprep.subr.mxu0 0.0
    %267 = vmatpush1.msra.mxu0 0.0
    %268 = vmatprep.subr.mxu0 0.0
    %269 = vmatpush1.msra.mxu0 0.0
    %270 = vmatprep.subr.mxu0 0.0
    %271 = vmatpush1.msra.mxu0 0.0
    %272 = vmatprep.subr.mxu0 0.0
    %273 = vmatpush1.msra.mxu0 0.0
    %274 = vmatprep.subr.mxu0 0.0
    %275 = vmatpush1.msra.mxu0 0.0
    %276 = vmatprep.subr.mxu0 0.0
    %277 = vmatpush1.msra.mxu0 0.0
    %278 = vmatprep.subr.mxu0 0.0
    %279 = vmatpush1.msra.mxu0 0.0
    %280 = vmatprep.subr.mxu0 0.0
    %281 = vmatpush1.msra.mxu0 0.0
    %282 = vmatprep.subr.mxu0 0.0
    %283 = vmatpush1.msra.mxu0 0.0
    %284 = vmatprep.subr.mxu0 0.0
    %285 = vmatpush1.msra.mxu0 0.0
    %286 = vmatprep.subr.mxu0 0.0
    %287 = vmatpush1.msra.mxu0 0.0
    %288 = vmatprep.subr.mxu0 0.0
    %289 = vmatpush1.msra.mxu0 0.0
    %290 = vmatprep.subr.mxu0 0.0
    %291 = vmatpush1.msra.mxu0 0.0
    %292 = vmatprep.subr.mxu0 0.0
    %293 = vmatpush1.msra.mxu0 0.0
    %294 = vmatprep.mubr.f32.mxu0 0.0
    %295 = vmatmul.mubr.f32.gmra.mrb[0].mxu0 %v228
    %v296 = vpop.f32.mrb[0].mxu0
    %v297 = vadd.f32 0.0, %v296
    %v298 = vpop.f32.mrb[0].mxu0
    %299 = vdwg.mxu0
    %v301 = vsel %vm226, %v225, 0
    %303 = vmatprep.subr.mxu0 0.0
    %304 = vmatpush1.msra.mxu0 %v27
    %305 = vmatprep.subr.mxu0 0.0
    %306 = vmatpush1.msra.mxu0 0.0
    %307 = vmatprep.subr.mxu0 0.0
    %308 = vmatpush1.msra.mxu0 0.0
    %309 = vmatprep.subr.mxu0 0.0
    %310 = vmatpush1.msra.mxu0 0.0
    %311 = vmatprep.subr.mxu0 0.0
    %312 = vmatpush1.msra.mxu0 0.0
    %313 = vmatprep.subr.mxu0 0.0
    %314 = vmatpush1.msra.mxu0 0.0
    %315 = vmatprep.subr.mxu0 0.0
    %316 = vmatpush1.msra.mxu0 0.0
    %317 = vmatprep.subr.mxu0 0.0
    %318 = vmatpush1.msra.mxu0 0.0
    %319 = vmatprep.subr.mxu0 0.0
    %320 = vmatpush1.msra.mxu0 0.0
    %321 = vmatprep.subr.mxu0 0.0
    %322 = vmatpush1.msra.mxu0 0.0
    %323 = vmatprep.subr.mxu0 0.0
    %324 = vmatpush1.msra.mxu0 0.0
    %325 = vmatprep.subr.mxu0 0.0
    %326 = vmatpush1.msra.mxu0 0.0
    %327 = vmatprep.subr.mxu0 0.0
    %328 = vmatpush1.msra.mxu0 0.0
    %329 = vmatprep.subr.mxu0 0.0
    %330 = vmatpush1.msra.mxu0 0.0
    %331 = vmatprep.subr.mxu0 0.0
    %332 = vmatpush1.msra.mxu0 0.0
    %333 = vmatprep.subr.mxu0 0.0
    %334 = vmatpush1.msra.mxu0 0.0
    %335 = vmatprep.subr.mxu0 0.0
    %336 = vmatpush1.msra.mxu0 0.0
    %337 = vmatprep.subr.mxu0 0.0
    %338 = vmatpush1.msra.mxu0 0.0
    %339 = vmatprep.subr.mxu0 0.0
    %340 = vmatpush1.msra.mxu0 0.0
    %341 = vmatprep.subr.mxu0 0.0
    %342 = vmatpush1.msra.mxu0 0.0
    %343 = vmatprep.subr.mxu0 0.0
    %344 = vmatpush1.msra.mxu0 0.0
    %345 = vmatprep.subr.mxu0 0.0
    %346 = vmatpush1.msra.mxu0 0.0
    %347 = vmatprep.subr.mxu0 0.0
    %348 = vmatpush1.msra.mxu0 0.0
    %349 = vmatprep.subr.mxu0 0.0
    %350 = vmatpush1.msra.mxu0 0.0
    %351 = vmatprep.subr.mxu0 0.0
    %352 = vmatpush1.msra.mxu0 0.0
    %353 = vmatprep.subr.mxu0 0.0
    %354 = vmatpush1.msra.mxu0 0.0
    %355 = vmatprep.subr.mxu0 0.0
    %356 = vmatpush1.msra.mxu0 0.0
    %357 = vmatprep.subr.mxu0 0.0
    %358 = vmatpush1.msra.mxu0 0.0
    %359 = vmatprep.subr.mxu0 0.0
    %360 = vmatpush1.msra.mxu0 0.0
    %361 = vmatprep.subr.mxu0 0.0
    %362 = vmatpush1.msra.mxu0 0.0
    %363 = vmatprep.subr.mxu0 0.0
    %364 = vmatpush1.msra.mxu0 0.0
    %365 = vmatprep.subr.mxu0 0.0
    %366 = vmatpush1.msra.mxu0 0.0
    %367 = vmatprep.mubr.f32.mxu0 0.0
    %368 = vmatmul.mubr.f32.gmra.mrb[0].mxu0 %v301
    %v369 = vpop.f32.mrb[0].mxu0
    %v370 = vadd.f32 0.0, %v369
    %v371 = vpop.f32.mrb[0].mxu0
    %372 = vdwg.mxu0
    %v375 = vrot.slane %v370, 7
    %vm376 = vcmask 1041409
    %v377 = vsel %vm376, %v375, %v297
    %vm379 = vcmask 517120
    %380 = vst.msk [vmem:[#allocation5] sm:$0x3] %vm379, %v377
    // Predicated region
    $region14: #{tpu_custom_call.1} parent=1 // pred_check
      _
    $region15: #{tpu_custom_call.1} parent=1 // pred_check_branch
      %382 = sbr.rel (0) target = $region17
    $region16: #{tpu_custom_call.1} parent=1 // pred_region
      %s384 = ssub.s32 32, 32
      %385 = vsyncadd [#allocation4], %s384
      %s387 = sshll.u32 [#allocation5], 4
      %s388 = int_to_ptr.vmem [resolvable:$true] %s387
      %390 = dma.vmem_to_hbm [thread:$0]  %s388, 32, %s2, [#allocation4]
    $region17: #{tpu_custom_call.1} parent=1 // pred_fallthru
      _
    // Predicated region
    $region18: #{tpu_custom_call.1} parent=1 // pred_check
      _
    $region19: #{tpu_custom_call.1} parent=1 // pred_check_branch
      %392 = sbr.rel (0) target = $region21
    $region20: #{tpu_custom_call.1} parent=1 // pred_region
      %393 = dma.done [#allocation4], 32
    $region21: #{tpu_custom_call.1} parent=1 // pred_fallthru
      _
    %394 = vsyncpa [#allocation3], 1
    %395 = vsyncpa [#allocation4], 1

</llo_original>
